<compile_context>
chip_gen: v6e
topology: v6e:2x2x1
jax: 0.10.0
libtpu: 0.0.40
codegen_flags: <defaults>
</compile_context>

<pallas_src>
import functools

import jax
import jax.numpy as jnp
from jax.experimental import pallas as pl
from jax.experimental.pallas import tpu as pltpu

# ---- module hyper-parameters (synthetic, deterministic) ---------------------
STATE_SIZE = 16          # num_state
HIDDEN = 100             # fixed in the module: nn.Linear(num_state, 100)
ACTION_SIZE = 8          # num_action

_LANE = 128
_SUBLANE = 8


def _round_up(x, m):
    return ((x + m - 1) // m) * m


H_PAD = _round_up(HIDDEN, _LANE)        # 128
A_PAD = _round_up(ACTION_SIZE, _LANE)   # 128

_NEG_LARGE = -1e30                      # softmax mask value for padded action columns


# ---- Pallas kernel ----------------------------------------------------------
def _actor_kernel(x_ref, w1_ref, b1_ref, w2_ref, b2_ref, o_ref):
    # x:  [TB, S]      f32     w1: [S, H_PAD]      bf16    b1: [1, H_PAD]  f32
    # w2: [H_PAD, A_PAD] bf16  b2: [1, A_PAD]      f32     o:  [TB, A_PAD] f32
    x = x_ref[...].astype(jnp.bfloat16)

    # fc1 + ReLU (bf16 MXU matmul, f32 accumulate / elementwise)
    h = jnp.dot(x, w1_ref[...], preferred_element_type=jnp.float32)
    h = jnp.maximum(h + b1_ref[...], 0.0)

    # action_head logits
    logits = jnp.dot(h.astype(jnp.bfloat16), w2_ref[...],
                     preferred_element_type=jnp.float32)
    logits = logits + b2_ref[...]

    # mask padded action columns so they get zero probability
    col = jax.lax.broadcasted_iota(jnp.int32, logits.shape, 1)
    logits = jnp.where(col < ACTION_SIZE, logits, _NEG_LARGE)

    # numerically stable softmax over the action axis
    m = jnp.max(logits, axis=-1, keepdims=True)
    e = jnp.exp(logits - m)
    denom = jnp.sum(e, axis=-1, keepdims=True)
    o_ref[...] = (e / denom).astype(o_ref.dtype)


# ---- wrapper ----------------------------------------------------------------
@functools.partial(jax.jit, static_argnames=("tb_max",))
def actor_forward(x, w1_p, b1_p, w2_p, b2_p, *, tb_max=512):
    """x: [B, STATE_SIZE] f32 -> action probabilities [B, ACTION_SIZE] f32."""
    B, S = x.shape

    # batch tile: multiple of 8 sublanes, capped so VMEM stays tiny even on v7x (64 MiB)
    tb = min(tb_max, _round_up(B, _SUBLANE))
    b_pad = _round_up(B, tb)
    if b_pad != B:
        x = jnp.pad(x, ((0, b_pad - B), (0, 0)))

    grid = (b_pad // tb,)

    flops = 2 * b_pad * S * H_PAD + 2 * b_pad * H_PAD * A_PAD
    bytes_accessed = 4 * (b_pad * S + b_pad * A_PAD + H_PAD + A_PAD) \
        + 2 * (S * H_PAD + H_PAD * A_PAD)

    out = pl.pallas_call(
        _actor_kernel,
        out_shape=jax.ShapeDtypeStruct((b_pad, A_PAD), jnp.float32),
        grid=grid,
        in_specs=[
            pl.BlockSpec((tb, S), lambda i: (i, 0)),          # x: tiled over batch
            pl.BlockSpec((S, H_PAD), lambda i: (0, 0)),       # w1: VMEM-resident
            pl.BlockSpec((1, H_PAD), lambda i: (0, 0)),       # b1
            pl.BlockSpec((H_PAD, A_PAD), lambda i: (0, 0)),   # w2
            pl.BlockSpec((1, A_PAD), lambda i: (0, 0)),       # b2
        ],
        out_specs=pl.BlockSpec((tb, A_PAD), lambda i: (i, 0)),
        compiler_params=pltpu.CompilerParams(
            dimension_semantics=("parallel",)),
        cost_estimate=pl.CostEstimate(
            flops=flops,
            transcendentals=b_pad * A_PAD,
            bytes_accessed=bytes_accessed),
    )(x, w1_p, b1_p, w2_p, b2_p)

    return out[:B, :ACTION_SIZE]


# ---- deterministic parameter init (nn.Linear default: U(-1/sqrt(fan_in), +)) ----
def make_params(key):
    k1, k2, k3, k4 = jax.random.split(key, 4)
    lim1 = 1.0 / jnp.sqrt(STATE_SIZE)
    lim2 = 1.0 / jnp.sqrt(HIDDEN)
    w1 = jax.random.uniform(k1, (HIDDEN, STATE_SIZE), jnp.float32, -lim1, lim1)
    b1 = jax.random.uniform(k2, (HIDDEN,), jnp.float32, -lim1, lim1)
    w2 = jax.random.uniform(k3, (ACTION_SIZE, HIDDEN), jnp.float32, -lim2, lim2)
    b2 = jax.random.uniform(k4, (ACTION_SIZE,), jnp.float32, -lim2, lim2)
    return w1, b1, w2, b2


def pack_params(w1, b1, w2, b2):
    """Pre-transpose to [in, out], zero-pad to lane-friendly sizes, cast weights to bf16."""
    w1_p = jnp.zeros((STATE_SIZE, H_PAD), jnp.float32).at[:, :HIDDEN].set(w1.T)
    b1_p = jnp.zeros((1, H_PAD), jnp.float32).at[0, :HIDDEN].set(b1)
    w2_p = jnp.zeros((H_PAD, A_PAD), jnp.float32).at[:HIDDEN, :ACTION_SIZE].set(w2.T)
    b2_p = jnp.zeros((1, A_PAD), jnp.float32).at[0, :ACTION_SIZE].set(b2)
    return w1_p.astype(jnp.bfloat16), b1_p, w2_p.astype(jnp.bfloat16), b2_p


# ---- reference (plain JAX, same bf16-operand / f32-accumulate numerics) ------
def reference_forward(x, w1, b1, w2, b2):
    h = jnp.dot(x.astype(jnp.bfloat16), w1.T.astype(jnp.bfloat16),
                preferred_element_type=jnp.float32) + b1
    h = jnp.maximum(h, 0.0)
    logits = jnp.dot(h.astype(jnp.bfloat16), w2.T.astype(jnp.bfloat16),
                     preferred_element_type=jnp.float32) + b2
    return jax.nn.softmax(logits, axis=1)


if __name__ == "__main__":
    key = jax.random.PRNGKey(0)
    k_params, k_x = jax.random.split(key)

    w1, b1, w2, b2 = make_params(k_params)
    w1_p, b1_p, w2_p, b2_p = pack_params(w1, b1, w2, b2)

    B = 8
    x = jax.random.normal(k_x, (B, STATE_SIZE), dtype=jnp.float32)

    probs = actor_forward(x, w1_p, b1_p, w2_p, b2_p)
    probs = jax.block_until_ready(probs)

    ref = reference_forward(x, w1, b1, w2, b2)
    assert probs.shape == (B, ACTION_SIZE)
    assert jnp.allclose(jnp.sum(probs, axis=-1), 1.0, atol=1e-5), "rows must sum to 1"
    assert jnp.allclose(probs, ref, atol=1e-4, rtol=1e-4), "mismatch vs reference"

    print("KERNEL_OK")
</pallas_src>

<mosaic_0001>
module attributes {stable_mosaic.version = 11 : i64} {
  func.func @_actor_kernel(%arg0: i32, %arg1: memref<8x16xf32, #tpu.memory_space<vmem>>, %arg2: memref<16x128xbf16, #tpu.memory_space<vmem>>, %arg3: memref<1x128xf32, #tpu.memory_space<vmem>>, %arg4: memref<128x128xbf16, #tpu.memory_space<vmem>>, %arg5: memref<1x128xf32, #tpu.memory_space<vmem>>, %arg6: memref<8x128xf32, #tpu.memory_space<vmem>>) attributes {dimension_semantics = [#tpu.dimension_semantics<parallel>], iteration_bounds = array<i64: 1>, scalar_prefetch = 0 : i64, scratch_operands = 0 : i64, tpu.core_type = #tpu.core_type<tc>, window_params = [{transform_indices = @transform_0, window_bounds = array<i64: 8, 16>}, {pipeline_mode = #tpu.pipeline_mode<synchronous>, transform_indices = @transform_1, window_bounds = array<i64: 16, 128>}, {pipeline_mode = #tpu.pipeline_mode<synchronous>, transform_indices = @transform_2, window_bounds = array<i64: 1, 128>}, {pipeline_mode = #tpu.pipeline_mode<synchronous>, transform_indices = @transform_3, window_bounds = array<i64: 128, 128>}, {pipeline_mode = #tpu.pipeline_mode<synchronous>, transform_indices = @transform_4, window_bounds = array<i64: 1, 128>}, {transform_indices = @transform_5, window_bounds = array<i64: 8, 128>}]} {
    %c0 = arith.constant 0 : index
    %c0_0 = arith.constant 0 : index
    %0 = vector.load %arg1[%c0, %c0_0] : memref<8x16xf32, #tpu.memory_space<vmem>>, vector<8x16xf32>
    %1 = arith.truncf %0 : vector<8x16xf32> to vector<8x16xbf16>
    %c0_1 = arith.constant 0 : index
    %c0_2 = arith.constant 0 : index
    %2 = vector.load %arg2[%c0_1, %c0_2] : memref<16x128xbf16, #tpu.memory_space<vmem>>, vector<16x128xbf16>
    %cst = arith.constant dense<0.000000e+00> : vector<8x128xf32>
    %3 = tpu.matmul %1, %2, %cst {dimension_numbers = #tpu.dot_dimension_numbers<[1], [0], [0], [1], [0, 0, 1, 1], [], []>} : vector<8x16xbf16>, vector<16x128xbf16>, vector<8x128xf32> -> vector<8x128xf32>
    %c0_3 = arith.constant 0 : index
    %c0_4 = arith.constant 0 : index
    %4 = vector.load %arg3[%c0_3, %c0_4] : memref<1x128xf32, #tpu.memory_space<vmem>>, vector<1x128xf32>
    %5 = vector.broadcast %4 : vector<1x128xf32> to vector<8x128xf32>
    %6 = arith.addf %3, %5 : vector<8x128xf32>
    %cst_5 = arith.constant 0.000000e+00 : f32
    %7 = vector.broadcast %cst_5 : f32 to vector<8x128xf32>
    %8 = arith.maximumf %6, %7 : vector<8x128xf32>
    %9 = arith.truncf %8 : vector<8x128xf32> to vector<8x128xbf16>
    %c0_6 = arith.constant 0 : index
    %c0_7 = arith.constant 0 : index
    %10 = vector.load %arg4[%c0_6, %c0_7] : memref<128x128xbf16, #tpu.memory_space<vmem>>, vector<128x128xbf16>
    %cst_8 = arith.constant dense<0.000000e+00> : vector<8x128xf32>
    %11 = tpu.matmul %9, %10, %cst_8 {dimension_numbers = #tpu.dot_dimension_numbers<[1], [0], [0], [1], [0, 0, 1, 1], [], []>} : vector<8x128xbf16>, vector<128x128xbf16>, vector<8x128xf32> -> vector<8x128xf32>
    %c0_9 = arith.constant 0 : index
    %c0_10 = arith.constant 0 : index
    %12 = vector.load %arg5[%c0_9, %c0_10] : memref<1x128xf32, #tpu.memory_space<vmem>>, vector<1x128xf32>
    %13 = vector.broadcast %12 : vector<1x128xf32> to vector<8x128xf32>
    %14 = arith.addf %11, %13 : vector<8x128xf32>
    %15 = tpu.iota {dimensions = array<i32: 1>} : vector<8x128xi32>
    %c8_i32 = arith.constant 8 : i32
    %16 = vector.broadcast %c8_i32 : i32 to vector<8x128xi32>
    %17 = arith.cmpi slt, %15, %16 : vector<8x128xi32>
    %cst_11 = arith.constant -1.000000e+30 : f32
    %18 = vector.broadcast %cst_11 : f32 to vector<8x128xf32>
    %19 = arith.select %17, %14, %18 : vector<8x128xi1>, vector<8x128xf32>
    %cst_12 = arith.constant dense<0xFF800000> : vector<8xf32>
    %20 = vector.multi_reduction <maximumf>, %19, %cst_12 [1] : vector<8x128xf32> to vector<8xf32>
    %21 = vector.shape_cast %20 : vector<8xf32> to vector<8x1xf32>
    %22 = vector.broadcast %21 : vector<8x1xf32> to vector<8x128xf32>
    %23 = arith.subf %19, %22 : vector<8x128xf32>
    %24 = math.exp %23 : vector<8x128xf32>
    %cst_13 = arith.constant dense<0.000000e+00> : vector<8xf32>
    %25 = vector.multi_reduction <add>, %24, %cst_13 [1] : vector<8x128xf32> to vector<8xf32>
    %26 = vector.shape_cast %25 : vector<8xf32> to vector<8x1xf32>
    %27 = vector.broadcast %26 : vector<8x1xf32> to vector<8x128xf32>
    %28 = arith.divf %24, %27 : vector<8x128xf32>
    %c0_14 = arith.constant 0 : index
    %c0_15 = arith.constant 0 : index
    %29 = vector.load %arg6[%c0_14, %c0_15] : memref<8x128xf32, #tpu.memory_space<vmem>>, vector<8x128xf32>
    tpu.vector_store %arg6[%c0_14, %c0_15], %28 {strides = array<i32>} : memref<8x128xf32, #tpu.memory_space<vmem>>, vector<8x128xf32>,
    return
  }
  func.func @transform_0(%arg0: i32) -> (i32, i32) {
    %c0_i32 = arith.constant 0 : i32
    %c0_i32_0 = arith.constant 0 : i32
    return %arg0, %c0_i32 : i32, i32
  }
  func.func @transform_1(%arg0: i32) -> (i32, i32) {
    %c0_i32 = arith.constant 0 : i32
    %c0_i32_0 = arith.constant 0 : i32
    %c0_i32_1 = arith.constant 0 : i32
    return %c0_i32, %c0_i32_0 : i32, i32
  }
  func.func @transform_2(%arg0: i32) -> (i32, i32) {
    %c0_i32 = arith.constant 0 : i32
    %c0_i32_0 = arith.constant 0 : i32
    %c0_i32_1 = arith.constant 0 : i32
    return %c0_i32, %c0_i32_0 : i32, i32
  }
  func.func @transform_3(%arg0: i32) -> (i32, i32) {
    %c0_i32 = arith.constant 0 : i32
    %c0_i32_0 = arith.constant 0 : i32
    %c0_i32_1 = arith.constant 0 : i32
    return %c0_i32, %c0_i32_0 : i32, i32
  }
  func.func @transform_4(%arg0: i32) -> (i32, i32) {
    %c0_i32 = arith.constant 0 : i32
    %c0_i32_0 = arith.constant 0 : i32
    %c0_i32_1 = arith.constant 0 : i32
    return %c0_i32, %c0_i32_0 : i32, i32
  }
  func.func @transform_5(%arg0: i32) -> (i32, i32) {
    %c0_i32 = arith.constant 0 : i32
    %c0_i32_0 = arith.constant 0 : i32
    return %arg0, %c0_i32 : i32, i32
  }
}

</mosaic_0001>

<llo_original>
// kernel: actor_forward.1
$region0: #{actor_forward.1}
  #allocation0 [shape = 'u32[]', space=smem, size = 0x4, offset = 0x4, fixed_abs, tag = 'smem constant byte address 0x4 - core index']
  #allocation1 [shape = 'u32[144,128]{1,0:T(1,128)}', space=vmem, size = 0x12000, scoped, tag = 'internal scratch']
  %s0 = inlined_call_operand.hbm [shape: f32[8,16], index: 0, kind: input, shape index: {}]
  %s1 = inlined_call_operand.hbm [shape: bf16[16,128], index: 1, kind: input, shape index: {}]
  %s2 = inlined_call_operand.vmem [shape: f32[1,128], index: 2, kind: input, shape index: {}]
  %s3 = inlined_call_operand.hbm [shape: bf16[128,128], index: 3, kind: input, shape index: {}]
  %s4 = inlined_call_operand.vmem [shape: f32[1,128], index: 4, kind: input, shape index: {}]
  %s5 = inlined_call_operand.hbm [shape: f32[8,128], index: 5, kind: output, shape index: {}]
  %s6 = sld [smem:[#allocation0]]
  $region42: #{actor_forward.1} parent=0
    _
  %s8 = ssub.s32 1, %s6
  %s9 = scalar_select 0, %s8, %s6
  $region1: #{actor_forward.1} parent=0
    #allocation2 [shape = 'u8[4096]{0}', space=vmem, size = 0x1000, scoped, tag = 'input window, operand 0, single buffered']
    #allocation3 [shape = 's32[1]{0}', space=sflag, size = 0x4, scoped, tag = 'scoped memory for actor_forward.1']
    #allocation4 [shape = 's32[1]{0}', space=sflag, size = 0x4, scoped, tag = 'scoped memory for actor_forward.1']
    #allocation5 [shape = 'u8[4096]{0}', space=vmem, size = 0x1000, scoped, tag = 'input window, operand 1, single buffered']
    #allocation6 [shape = 's32[1]{0}', space=sflag, size = 0x4, scoped, tag = 'scoped memory for actor_forward.1']
    #allocation7 [shape = 'u8[32768]{0}', space=vmem, size = 0x8000, scoped, tag = 'input window, operand 3, single buffered']
    #allocation8 [shape = 'u8[4096]{0}', space=vmem, size = 0x1000, scoped, tag = 'output window, operand 0, single buffered']
    %10 = vsyncpa [#allocation3], 0
    %11 = vsyncpa [#allocation6], 0
    %12 = vsyncpa [#allocation4], 0
    // Predicated region
    $region2: #{actor_forward.1} parent=1 // pred_check
      _
    $region3: #{actor_forward.1} parent=1 // pred_check_branch
      %14 = sbr.rel (0) target = $region5
    $region4: #{actor_forward.1} parent=1 // pred_region
      %s16 = ssub.s32 128, 128
      %17 = vsyncadd [#allocation3], %s16
      %s19 = sshll.u32 [#allocation2], 4
      %s20 = int_to_ptr.vmem [resolvable:$true] %s19
      %22 = dma.hbm_to_vmem [thread:$0]  %s0, 128, %s20, [#allocation3]
    $region5: #{actor_forward.1} parent=1 // pred_fallthru
      _
    // Predicated region
    $region6: #{actor_forward.1} parent=1 // pred_check
      _
    $region7: #{actor_forward.1} parent=1 // pred_check_branch
      %24 = sbr.rel (0) target = $region9
    $region8: #{actor_forward.1} parent=1 // pred_region
      %s26 = ssub.s32 128, 128
      %27 = vsyncadd [#allocation6], %s26
      %s28 = sshll.u32 [#allocation5], 4
      %s29 = int_to_ptr.vmem [resolvable:$true] %s28
      %34 = dma.hbm_to_vmem [thread:$0]  %s1, 128, %s29, [#allocation6], 64, 64, 4
    $region9: #{actor_forward.1} parent=1 // pred_fallthru
      _
    // Predicated region
    $region10: #{actor_forward.1} parent=1 // pred_check
      _
    $region11: #{actor_forward.1} parent=1 // pred_check_branch
      %36 = sbr.rel (0) target = $region13
    $region12: #{actor_forward.1} parent=1 // pred_region
      _
    $region13: #{actor_forward.1} parent=1 // pred_fallthru
      _
    // Predicated region
    $region14: #{actor_forward.1} parent=1 // pred_check
      _
    $region15: #{actor_forward.1} parent=1 // pred_check_branch
      %38 = sbr.rel (0) target = $region17
    $region16: #{actor_forward.1} parent=1 // pred_region
      %s40 = ssub.s32 1024, 1024
      %41 = vsyncadd [#allocation6], %s40
      %s42 = sshll.u32 [#allocation7], 4
      %s43 = int_to_ptr.vmem [resolvable:$true] %s42
      %48 = dma.hbm_to_vmem [thread:$0]  %s3, 1024, %s43, [#allocation6], 64, 64, 4
    $region17: #{actor_forward.1} parent=1 // pred_fallthru
      _
    // Predicated region
    $region18: #{actor_forward.1} parent=1 // pred_check
      _
    $region19: #{actor_forward.1} parent=1 // pred_check_branch
      %50 = sbr.rel (0) target = $region21
    $region20: #{actor_forward.1} parent=1 // pred_region
      _
    $region21: #{actor_forward.1} parent=1 // pred_fallthru
      _
    // Predicated region
    $region22: #{actor_forward.1} parent=1 // pred_check
      _
    $region23: #{actor_forward.1} parent=1 // pred_check_branch
      %52 = sbr.rel (0) target = $region25
    $region24: #{actor_forward.1} parent=1 // pred_region
      %53 = dma.done [#allocation3], 128
    $region25: #{actor_forward.1} parent=1 // pred_fallthru
      _
    // Predicated region
    $region26: #{actor_forward.1} parent=1 // pred_check
      _
    $region27: #{actor_forward.1} parent=1 // pred_check_branch
      %55 = sbr.rel (0) target = $region29
    $region28: #{actor_forward.1} parent=1 // pred_region
      %56 = dma.done [#allocation6], 128
    $region29: #{actor_forward.1} parent=1 // pred_fallthru
      _
    // Predicated region
    $region30: #{actor_forward.1} parent=1 // pred_check
      _
    $region31: #{actor_forward.1} parent=1 // pred_check_branch
      %58 = sbr.rel (0) target = $region33
    $region32: #{actor_forward.1} parent=1 // pred_region
      %59 = dma.done [#allocation6], 1024
    $region33: #{actor_forward.1} parent=1 // pred_fallthru
      _
    %v61 = vld [vmem:[#allocation2] sm:$0xff]
    %v62 = vpack.c.bf16 %v61, %v61
    %v63 = vld [vmem:[#allocation5] sm:$0xf]
    %v64 = vld [vmem:[#allocation5 + $0x4] sm:$0xf]
    %v65 = vld [vmem:[%s2] sm:$0x1]
    %v67 = vlaneseq
    %v68 = vshrl.u32 %v67, 7
    %v69 = vsub.s32 0, %v68
    %v70 = vrot.slane %v65, %v69
    %v74 = vunpack.c.l.b16 %v63
    %v75 = vunpack.c.l.b16 %v64
    %v76 = vpack.c.b16 %v75, %v74
    %vm78 = vcmask 130048
    %v80 = vsel %vm78, %v62, 0
    %82 = vmatprep.subr.bf16.mxu0 0
    %83 = vmatpush1.bf16.msra.mxu0 0
    %84 = vmatprep.subr.bf16.mxu0 0
    %85 = vmatpush1.bf16.msra.mxu0 0
    %86 = vmatprep.subr.bf16.mxu0 0
    %87 = vmatpush1.bf16.msra.mxu0 0
    %88 = vmatprep.subr.bf16.mxu0 0
    %89 = vmatpush1.bf16.msra.mxu0 0
    %90 = vmatprep.subr.bf16.mxu0 0
    %91 = vmatpush1.bf16.msra.mxu0 0
    %92 = vmatprep.subr.bf16.mxu0 0
    %93 = vmatpush1.bf16.msra.mxu0 0
    %94 = vmatprep.subr.bf16.mxu0 0
    %95 = vmatpush1.bf16.msra.mxu0 0
    %96 = vmatprep.subr.bf16.mxu0 0
    %97 = vmatpush1.bf16.msra.mxu0 %v76
    %98 = vmatprep.subr.bf16.mxu0 0
    %99 = vmatpush2.bf16.msra.mxu0 0
    %100 = vmatprep.subr.bf16.mxu0 0
    %101 = vmatpush2.bf16.msra.mxu0 0
    %102 = vmatprep.subr.bf16.mxu0 0
    %103 = vmatpush2.bf16.msra.mxu0 0
    %104 = vmatprep.subr.bf16.mxu0 0
    %105 = vmatpush2.bf16.msra.mxu0 0
    %106 = vmatprep.subr.bf16.mxu0 0
    %107 = vmatpush2.bf16.msra.mxu0 0
    %108 = vmatprep.subr.bf16.mxu0 0
    %109 = vmatpush2.bf16.msra.mxu0 0
    %110 = vmatprep.subr.bf16.mxu0 0
    %111 = vmatpush2.bf16.msra.mxu0 0
    %112 = vmatprep.subr.bf16.mxu0 0
    %113 = vmatpush2.bf16.msra.mxu0 0
    %114 = vmatprep.mubr.bf16.mxu0 0
    %115 = vmatmul.mubr.bf16.gmra.mxu0 %v80
    %v116 = vpop.f32.mrf.mxu0
    %v117 = vadd.f32 %v70, %v116
    %v118 = vpop.f32.mrf.mxu0
    %v119 = vpop.f32.mrf.mxu0
    %v120 = vpop.f32.mrf.mxu0
    %121 = vdwg.mxu0
    %v122 = vmax.f32 %v117, 0.0
    %v123 = vpack.c.bf16 %v122, %v122
    %v124 = vld [vmem:[#allocation7] sm:$0xf]
    %v125 = vld [vmem:[#allocation7 + $0x4] sm:$0xf]
    %v126 = vld [vmem:[#allocation7 + $0x8] sm:$0xf]
    %v127 = vld [vmem:[#allocation7 + $0xc] sm:$0xf]
    %v128 = vld [vmem:[#allocation7 + $0x10] sm:$0xf]
    %v129 = vld [vmem:[#allocation7 + $0x14] sm:$0xf]
    %v130 = vld [vmem:[#allocation7 + $0x18] sm:$0xf]
    %v131 = vld [vmem:[#allocation7 + $0x1c] sm:$0xf]
    %v132 = vld [vmem:[#allocation7 + $0x20] sm:$0xf]
    %v133 = vld [vmem:[#allocation7 + $0x24] sm:$0xf]
    %v134 = vld [vmem:[#allocation7 + $0x28] sm:$0xf]
    %v135 = vld [vmem:[#allocation7 + $0x2c] sm:$0xf]
    %v136 = vld [vmem:[#allocation7 + $0x30] sm:$0xf]
    %v137 = vld [vmem:[#allocation7 + $0x34] sm:$0xf]
    %v138 = vld [vmem:[#allocation7 + $0x38] sm:$0xf]
    %v139 = vld [vmem:[#allocation7 + $0x3c] sm:$0xf]
    %v140 = vld [vmem:[%s4] sm:$0x1]
    %v142 = vlaneseq
    %v143 = vshrl.u32 %v142, 7
    %v144 = vsub.s32 0, %v143
    %v145 = vrot.slane %v140, %v144
    %v163 = vunpack.c.l.b16 %v124
    %v164 = vunpack.c.l.b16 %v125
    %v165 = vunpack.c.l.b16 %v126
    %v166 = vunpack.c.l.b16 %v127
    %v167 = vunpack.c.l.b16 %v128
    %v168 = vunpack.c.l.b16 %v129
    %v169 = vunpack.c.l.b16 %v130
    %v170 = vunpack.c.l.b16 %v131
    %v171 = vunpack.c.l.b16 %v132
    %v172 = vunpack.c.l.b16 %v133
    %v173 = vunpack.c.l.b16 %v134
    %v174 = vunpack.c.l.b16 %v135
    %v175 = vunpack.c.l.b16 %v136
    %v176 = vunpack.c.l.b16 %v137
    %v177 = vunpack.c.l.b16 %v138
    %v178 = vunpack.c.l.b16 %v139
    %v179 = vpack.c.b16 %v164, %v163
    %v180 = vpack.c.b16 %v166, %v165
    %v181 = vpack.c.b16 %v168, %v167
    %v182 = vpack.c.b16 %v170, %v169
    %v183 = vpack.c.b16 %v172, %v171
    %v184 = vpack.c.b16 %v174, %v173
    %v185 = vpack.c.b16 %v176, %v175
    %v186 = vpack.c.b16 %v178, %v177
    %195 = vmatprep.subr.bf16.mxu0 0
    %196 = vmatpush1.bf16.msra.mxu0 %v186
    %197 = vmatprep.subr.bf16.mxu0 0
    %198 = vmatpush1.bf16.msra.mxu0 %v185
    %199 = vmatprep.subr.bf16.mxu0 0
    %200 = vmatpush1.bf16.msra.mxu0 %v184
    %201 = vmatprep.subr.bf16.mxu0 0
    %202 = vmatpush1.bf16.msra.mxu0 %v183
    %203 = vmatprep.subr.bf16.mxu0 0
    %204 = vmatpush1.bf16.msra.mxu0 %v182
    %205 = vmatprep.subr.bf16.mxu0 0
    %206 = vmatpush1.bf16.msra.mxu0 %v181
    %207 = vmatprep.subr.bf16.mxu0 0
    %208 = vmatpush1.bf16.msra.mxu0 %v180
    %209 = vmatprep.subr.bf16.mxu0 0
    %210 = vmatpush1.bf16.msra.mxu0 %v179
    %211 = vmatprep.subr.bf16.mxu0 0
    %212 = vmatpush2.bf16.msra.mxu0 0
    %213 = vmatprep.subr.bf16.mxu0 0
    %214 = vmatpush2.bf16.msra.mxu0 0
    %215 = vmatprep.subr.bf16.mxu0 0
    %216 = vmatpush2.bf16.msra.mxu0 0
    %217 = vmatprep.subr.bf16.mxu0 0
    %218 = vmatpush2.bf16.msra.mxu0 0
    %219 = vmatprep.subr.bf16.mxu0 0
    %220 = vmatpush2.bf16.msra.mxu0 0
    %221 = vmatprep.subr.bf16.mxu0 0
    %222 = vmatpush2.bf16.msra.mxu0 0
    %223 = vmatprep.subr.bf16.mxu0 0
    %224 = vmatpush2.bf16.msra.mxu0 0
    %225 = vmatprep.subr.bf16.mxu0 0
    %226 = vmatpush2.bf16.msra.mxu0 0
    %227 = vmatprep.mubr.bf16.mxu0 0
    %228 = vmatmul.mubr.bf16.gmra.mxu0 %v123
    %v229 = vpop.f32.mrf.mxu0
    %v230 = vadd.f32 %v145, %v229
    %v231 = vpop.f32.mrf.mxu0
    %v232 = vpop.f32.mrf.mxu0
    %v233 = vpop.f32.mrf.mxu0
    %234 = vdwg.mxu0
    %v235 = vlaneseq
    %v236 = vand.u32 %v235, 127
    %vm237 = vcmp.lt.s32.totalorder %v236, 8
    %v238 = vsel %vm237, %v230, -1e+30
    %239 = vmax.xlane.f32.xlu0 %v238
    %v240 = vpop.xlane.xlu0 %239
    %v241 = vsub.f32 %v238, %v240
    %v242 = vmul.f32 %v241, 1.442695
    %v243 = vpow.pop %v242
    %244 = vadd.xlane.f32.xlu0 %v243
    %v245 = vpop.xlane.xlu0 %244
    %v246 = vrcp.pop %v245
    %v247 = vmul.f32 %v243, %v246
    %248 = vst [vmem:[#allocation8] sm:$0xff] %v247
    // Predicated region
    $region34: #{actor_forward.1} parent=1 // pred_check
      _
    $region35: #{actor_forward.1} parent=1 // pred_check_branch
      %250 = sbr.rel (0) target = $region37
    $region36: #{actor_forward.1} parent=1 // pred_region
      %s252 = ssub.s32 128, 128
      %253 = vsyncadd [#allocation4], %s252
      %s255 = sshll.u32 [#allocation8], 4
      %s256 = int_to_ptr.vmem [resolvable:$true] %s255
      %258 = dma.vmem_to_hbm [thread:$0]  %s256, 128, %s5, [#allocation4]
    $region37: #{actor_forward.1} parent=1 // pred_fallthru
      _
    // Predicated region
    $region38: #{actor_forward.1} parent=1 // pred_check
      _
    $region39: #{actor_forward.1} parent=1 // pred_check_branch
      %260 = sbr.rel (0) target = $region41
    $region40: #{actor_forward.1} parent=1 // pred_region
      %261 = dma.done [#allocation4], 128
    $region41: #{actor_forward.1} parent=1 // pred_fallthru
      _
    %262 = vsyncpa [#allocation3], 1
    %263 = vsyncpa [#allocation6], 1
    %264 = vsyncpa [#allocation4], 1

</llo_original>
